<compile_context>
chip_gen: v7x
topology: tpu7x:2x2x1
jax: 0.10.0
libtpu: 0.0.40
codegen_flags: <defaults>
</compile_context>

<pallas_src>
import functools

import jax
import jax.numpy as jnp
from jax.experimental import pallas as pl
from jax.experimental.pallas import tpu as pltpu


# Safe on every generation: equals the scoped default on v6e/v7x, raises it on
# v5e, and leaves plenty of headroom under v7x's 64 MiB physical VMEM.
VMEM_LIMIT_BYTES = 32 * 1024 * 1024


def _pick_tile(dim, align, max_tile):
    """Largest multiple of `align` that divides `dim` and is <= max_tile.

    Falls back to the full dim only when the array is already small enough
    (or no aligned divisor exists), so we never silently load a huge array as
    a single block for common shapes.
    """
    if dim <= max_tile:
        return dim
    t = (max_tile // align) * align
    while t >= align:
        if dim % t == 0:
            return t
        t -= align
    return dim


# ----------------------------------------------------------------------------
# Fused matmul (+ bias, + optional tanh-GELU epilogue)
# ----------------------------------------------------------------------------

def _gelu_f32(x):
    # 0.5 * x * (1 + tanh(sqrt(2/pi) * (x + 0.044715 * x^3)))
    c = 0.7978845608028654  # sqrt(2 / pi)
    return 0.5 * x * (1.0 + jnp.tanh(c * (x + 0.044715 * (x * x * x))))


def _linear_kernel(x_ref, w_ref, b_ref, o_ref, acc_ref, *, apply_gelu):
    k = pl.program_id(2)

    @pl.when(k == 0)
    def _():
        acc_ref[...] = jnp.zeros_like(acc_ref)

    acc_ref[...] += jnp.dot(
        x_ref[...].astype(jnp.float32),
        w_ref[...].astype(jnp.float32),
        preferred_element_type=jnp.float32,
    )

    @pl.when(k == pl.num_programs(2) - 1)
    def _():
        y = acc_ref[...] + b_ref[...].astype(jnp.float32)
        if apply_gelu:  # fused GELU epilogue (no extra HBM round trip)
            y = _gelu_f32(y)
        o_ref[...] = y.astype(o_ref.dtype)


def linear(x, w, b=None, *, apply_gelu=False,
           tm_target=512, tn_target=512, tk_target=512):
    """y = act(x @ w + b), x: (..., K), w: (K, N), b: (N,) or None."""
    orig_shape = x.shape
    K = orig_shape[-1]
    N = w.shape[1]
    x2 = x.reshape(-1, K)
    M = x2.shape[0]

    b2 = (jnp.zeros((1, N), dtype=x.dtype) if b is None
          else b.reshape(1, N).astype(x.dtype))

    # Largest aligned dividing tiles under a ~1-3 MiB/block budget (f32),
    # so per-step pipeline overhead is amortized without risking VMEM OOM
    # even on v7x's smaller (64 MiB physical / 32 MiB scoped) VMEM.
    tm = _pick_tile(M, 8, tm_target)
    tn = _pick_tile(N, 128, tn_target)
    tk = _pick_tile(K, 128, tk_target)
    grid = (M // tm, N // tn, K // tk)

    out = pl.pallas_call(
        functools.partial(_linear_kernel, apply_gelu=apply_gelu),
        out_shape=jax.ShapeDtypeStruct((M, N), x.dtype),
        grid_spec=pltpu.PrefetchScalarGridSpec(
            num_scalar_prefetch=0,
            grid=grid,
            in_specs=[
                pl.BlockSpec((tm, tk), lambda i, j, k: (i, k)),
                pl.BlockSpec((tk, tn), lambda i, j, k: (k, j)),
                pl.BlockSpec((1, tn), lambda i, j, k: (0, j)),
            ],
            out_specs=pl.BlockSpec((tm, tn), lambda i, j, k: (i, j)),
            scratch_shapes=[pltpu.VMEM((tm, tn), jnp.float32)],
        ),
        compiler_params=pltpu.CompilerParams(
            dimension_semantics=("parallel", "parallel", "arbitrary"),
            vmem_limit_bytes=VMEM_LIMIT_BYTES,
        ),
    )(x2, w, b2)
    return out.reshape(orig_shape[:-1] + (N,))


# ----------------------------------------------------------------------------
# LayerNorm (scale * (x - mean) / sqrt(var + eps) + shift), var unbiased=False
# ----------------------------------------------------------------------------

def _layernorm_kernel(x_ref, scale_ref, shift_ref, o_ref, *, eps):
    x = x_ref[...].astype(jnp.float32)
    mean = jnp.mean(x, axis=-1, keepdims=True)
    cen = x - mean
    var = jnp.mean(cen * cen, axis=-1, keepdims=True)
    inv = jax.lax.rsqrt(var + eps)
    y = cen * inv * scale_ref[...].astype(jnp.float32) \
        + shift_ref[...].astype(jnp.float32)
    o_ref[...] = y.astype(o_ref.dtype)


def layernorm(x, scale, shift, *, eps=1e-5):
    orig_shape = x.shape
    D = orig_shape[-1]
    x2 = x.reshape(-1, D)
    rows = x2.shape[0]

    # ~2 MiB f32 input block per grid step (mem-bound op: big tiles >> small).
    tr_target = max(8, (2 * 1024 * 1024) // (D * 4))
    tr = _pick_tile(rows, 8, tr_target)
    grid = (rows // tr,)

    out = pl.pallas_call(
        functools.partial(_layernorm_kernel, eps=eps),
        out_shape=jax.ShapeDtypeStruct((rows, D), x.dtype),
        grid_spec=pltpu.PrefetchScalarGridSpec(
            num_scalar_prefetch=0,
            grid=grid,
            in_specs=[
                pl.BlockSpec((tr, D), lambda i: (i, 0)),
                pl.BlockSpec((1, D), lambda i: (0, 0)),
                pl.BlockSpec((1, D), lambda i: (0, 0)),
            ],
            out_specs=pl.BlockSpec((tr, D), lambda i: (i, 0)),
        ),
        compiler_params=pltpu.CompilerParams(
            dimension_semantics=("parallel",),
            vmem_limit_bytes=VMEM_LIMIT_BYTES,
        ),
    )(x2, scale.reshape(1, D), shift.reshape(1, D))
    return out.reshape(orig_shape)


# ----------------------------------------------------------------------------
# Causal softmax attention, one (batch * head) slice per grid step
# ----------------------------------------------------------------------------

def _attention_kernel(q_ref, k_ref, v_ref, o_ref, *, scale):
    q = q_ref[...][0].astype(jnp.float32)   # (S, D)
    k = k_ref[...][0].astype(jnp.float32)
    v = v_ref[...][0].astype(jnp.float32)

    # scores = q @ k^T * scale   (contract last dims; no explicit transpose)
    s = jax.lax.dot_general(q, k, (((1,), (1,)), ((), ())),
                            preferred_element_type=jnp.float32) * scale
    S = s.shape[0]
    row = jax.lax.broadcasted_iota(jnp.int32, (S, S), 0)
    col = jax.lax.broadcasted_iota(jnp.int32, (S, S), 1)
    s = jnp.where(col > row, -jnp.inf, s)   # causal mask

    m = jnp.max(s, axis=-1, keepdims=True)
    p = jnp.exp(s - m)
    l = jnp.sum(p, axis=-1, keepdims=True)
    o = jnp.dot(p / l, v, preferred_element_type=jnp.float32)
    o_ref[...] = o[None, :, :].astype(o_ref.dtype)


def causal_attention(q, k, v, *, scale):
    """q, k, v: (B*H, S, D) -> (B*H, S, D)."""
    BH, S, D = q.shape
    return pl.pallas_call(
        functools.partial(_attention_kernel, scale=scale),
        out_shape=jax.ShapeDtypeStruct((BH, S, D), q.dtype),
        grid_spec=pltpu.PrefetchScalarGridSpec(
            num_scalar_prefetch=0,
            grid=(BH,),
            in_specs=[
                pl.BlockSpec((1, S, D), lambda i: (i, 0, 0)),
                pl.BlockSpec((1, S, D), lambda i: (i, 0, 0)),
                pl.BlockSpec((1, S, D), lambda i: (i, 0, 0)),
            ],
            out_specs=pl.BlockSpec((1, S, D), lambda i: (i, 0, 0)),
        ),
        compiler_params=pltpu.CompilerParams(
            dimension_semantics=("parallel",),
            vmem_limit_bytes=VMEM_LIMIT_BYTES,
        ),
    )(q, k, v)


# ----------------------------------------------------------------------------
# GPT model (parameters + Pallas forward + pure-jnp reference)
# ----------------------------------------------------------------------------

def init_params(key, cfg):
    E = cfg["emb_dim"]; V = cfg["vocab_size"]; C = cfg["context_length"]

    def nxt():
        nonlocal key
        key, sub = jax.random.split(key)
        return sub

    def w(shape, std=0.02):
        return jax.random.normal(nxt(), shape, dtype=jnp.float32) * std

    params = {
        "tok_emb": w((V, E)),
        "pos_emb": w((C, E)),
        "lnf_scale": 1.0 + 0.1 * w((E,), std=1.0),
        "lnf_shift": 0.1 * w((E,), std=1.0),
        "W_out": w((E, V)),
        "blocks": [],
    }
    for _ in range(cfg["n_layers"]):
        params["blocks"].append({
            "ln1_scale": 1.0 + 0.1 * w((E,), std=1.0),
            "ln1_shift": 0.1 * w((E,), std=1.0),
            "Wq": w((E, E)), "Wk": w((E, E)), "Wv": w((E, E)),   # qkv_bias=False
            "Wo": w((E, E)), "bo": w((E,)),
            "ln2_scale": 1.0 + 0.1 * w((E,), std=1.0),
            "ln2_shift": 0.1 * w((E,), std=1.0),
            "W_fc1": w((E, 4 * E)), "b_fc1": w((4 * E,)),
            "W_fc2": w((4 * E, E)), "b_fc2": w((E,)),
        })
    return params


def gpt_forward_pallas(params, in_idx, cfg):
    B, S = in_idx.shape
    E = cfg["emb_dim"]; H = cfg["n_heads"]; hd = E // H

    # TODO(synk): embedding gather stays in jnp (jnp.take); a Pallas DMA-gather
    # adds nothing for this access pattern.
    x = jnp.take(params["tok_emb"], in_idx, axis=0) + params["pos_emb"][:S]
    # drop_emb / drop_shortcut / attention dropout: identity (eval / deterministic).

    def split_heads(t):
        return t.reshape(B, S, H, hd).transpose(0, 2, 1, 3).reshape(B * H, S, hd)

    for blk in params["blocks"]:
        shortcut = x
        h = layernorm(x, blk["ln1_scale"], blk["ln1_shift"])
        q = linear(h, blk["Wq"])
        k = linear(h, blk["Wk"])
        v = linear(h, blk["Wv"])
        ctx = causal_attention(split_heads(q), split_heads(k), split_heads(v),
                               scale=1.0 / (hd ** 0.5))
        ctx = ctx.reshape(B, H, S, hd).transpose(0, 2, 1, 3).reshape(B, S, E)
        ctx = linear(ctx, blk["Wo"], blk["bo"])
        x = ctx + shortcut

        shortcut = x
        h = layernorm(x, blk["ln2_scale"], blk["ln2_shift"])
        h = linear(h, blk["W_fc1"], blk["b_fc1"], apply_gelu=True)  # fc1 + GELU fused
        h = linear(h, blk["W_fc2"], blk["b_fc2"])
        x = h + shortcut

    x = layernorm(x, params["lnf_scale"], params["lnf_shift"])
    return linear(x, params["W_out"])


# ---- pure-jnp reference (for correctness check) ----------------------------

def _gelu_ref(x):
    c = jnp.sqrt(2.0 / jnp.pi)
    return 0.5 * x * (1.0 + jnp.tanh(c * (x + 0.044715 * x ** 3)))


def _layernorm_ref(x, scale, shift, eps=1e-5):
    mean = x.mean(-1, keepdims=True)
    var = jnp.mean((x - mean) ** 2, -1, keepdims=True)
    return scale * (x - mean) / jnp.sqrt(var + eps) + shift


def gpt_forward_ref(params, in_idx, cfg):
    P = jax.lax.Precision.HIGHEST
    B, S = in_idx.shape
    E = cfg["emb_dim"]; H = cfg["n_heads"]; hd = E // H

    x = jnp.take(params["tok_emb"], in_idx, axis=0) + params["pos_emb"][:S]
    for blk in params["blocks"]:
        sc = x
        h = _layernorm_ref(x, blk["ln1_scale"], blk["ln1_shift"])
        q = jnp.dot(h, blk["Wq"], precision=P).reshape(B, S, H, hd).transpose(0, 2, 1, 3)
        k = jnp.dot(h, blk["Wk"], precision=P).reshape(B, S, H, hd).transpose(0, 2, 1, 3)
        v = jnp.dot(h, blk["Wv"], precision=P).reshape(B, S, H, hd).transpose(0, 2, 1, 3)
        s = jnp.einsum("bhqd,bhkd->bhqk", q, k, precision=P) / (hd ** 0.5)
        mask = jnp.triu(jnp.ones((S, S), dtype=jnp.float32), k=1).astype(bool)
        s = jnp.where(mask, -jnp.inf, s)
        wts = jax.nn.softmax(s, axis=-1)
        ctx = jnp.einsum("bhqk,bhkd->bhqd", wts, v, precision=P)
        ctx = ctx.transpose(0, 2, 1, 3).reshape(B, S, E)
        ctx = jnp.dot(ctx, blk["Wo"], precision=P) + blk["bo"]
        x = ctx + sc

        sc = x
        h = _layernorm_ref(x, blk["ln2_scale"], blk["ln2_shift"])
        h = _gelu_ref(jnp.dot(h, blk["W_fc1"], precision=P) + blk["b_fc1"])
        h = jnp.dot(h, blk["W_fc2"], precision=P) + blk["b_fc2"]
        x = h + sc

    x = _layernorm_ref(x, params["lnf_scale"], params["lnf_shift"])
    return jnp.dot(x, params["W_out"], precision=P)


if __name__ == "__main__":
    cfg = dict(vocab_size=256, context_length=16, emb_dim=64,
               n_heads=4, n_layers=2, drop_rate=0.0, qkv_bias=False)

    key = jax.random.PRNGKey(0)
    key, pkey, ikey = jax.random.split(key, 3)
    params = init_params(pkey, cfg)

    batch, seq = 2, 16
    in_idx = jax.random.randint(ikey, (batch, seq), 0, cfg["vocab_size"])

    logits = gpt_forward_pallas(params, in_idx, cfg)
    logits = jax.block_until_ready(logits)

    ref = gpt_forward_ref(params, in_idx, cfg)

    assert logits.shape == (batch, seq, cfg["vocab_size"])
    assert logits.dtype == jnp.float32
    assert jnp.allclose(logits, ref, atol=2e-3, rtol=2e-3), (
        float(jnp.max(jnp.abs(logits - ref))))
    print("KERNEL_OK")
</pallas_src>

<mosaic_0001>
module attributes {stable_mosaic.version = 11 : i64} {
  func.func @_layernorm_kernel(%arg0: i32, %arg1: memref<32x64xf32, #tpu.memory_space<vmem>>, %arg2: memref<1x64xf32, #tpu.memory_space<vmem>>, %arg3: memref<1x64xf32, #tpu.memory_space<vmem>>, %arg4: memref<32x64xf32, #tpu.memory_space<vmem>>) attributes {dimension_semantics = [#tpu.dimension_semantics<parallel>], iteration_bounds = array<i64: 1>, scalar_prefetch = 0 : i64, scratch_operands = 0 : i64, tpu.core_type = #tpu.core_type<tc>, window_params = [{transform_indices = @transform_0, window_bounds = array<i64: 32, 64>}, {pipeline_mode = #tpu.pipeline_mode<synchronous>, transform_indices = @transform_1, window_bounds = array<i64: 1, 64>}, {pipeline_mode = #tpu.pipeline_mode<synchronous>, transform_indices = @transform_2, window_bounds = array<i64: 1, 64>}, {transform_indices = @transform_3, window_bounds = array<i64: 32, 64>}]} {
    %c0 = arith.constant 0 : index
    %c0_0 = arith.constant 0 : index
    %0 = vector.load %arg1[%c0, %c0_0] : memref<32x64xf32, #tpu.memory_space<vmem>>, vector<32x64xf32>
    %cst = arith.constant dense<0.000000e+00> : vector<32xf32>
    %1 = vector.multi_reduction <add>, %0, %cst [1] : vector<32x64xf32> to vector<32xf32>
    %2 = vector.shape_cast %1 : vector<32xf32> to vector<32x1xf32>
    %cst_1 = arith.constant 6.400000e+01 : f32
    %3 = vector.broadcast %cst_1 : f32 to vector<32x1xf32>
    %4 = arith.divf %2, %3 : vector<32x1xf32>
    %5 = vector.broadcast %4 : vector<32x1xf32> to vector<32x64xf32>
    %6 = arith.subf %0, %5 : vector<32x64xf32>
    %7 = arith.mulf %6, %6 : vector<32x64xf32>
    %cst_2 = arith.constant dense<0.000000e+00> : vector<32xf32>
    %8 = vector.multi_reduction <add>, %7, %cst_2 [1] : vector<32x64xf32> to vector<32xf32>
    %9 = vector.shape_cast %8 : vector<32xf32> to vector<32x1xf32>
    %cst_3 = arith.constant 6.400000e+01 : f32
    %10 = vector.broadcast %cst_3 : f32 to vector<32x1xf32>
    %11 = arith.divf %9, %10 : vector<32x1xf32>
    %cst_4 = arith.constant 9.99999974E-6 : f32
    %12 = vector.broadcast %cst_4 : f32 to vector<32x1xf32>
    %13 = arith.addf %11, %12 : vector<32x1xf32>
    %14 = math.rsqrt %13 : vector<32x1xf32>
    %15 = vector.broadcast %14 : vector<32x1xf32> to vector<32x64xf32>
    %16 = arith.mulf %6, %15 : vector<32x64xf32>
    %c0_5 = arith.constant 0 : index
    %c0_6 = arith.constant 0 : index
    %17 = vector.load %arg2[%c0_5, %c0_6] : memref<1x64xf32, #tpu.memory_space<vmem>>, vector<1x64xf32>
    %18 = vector.broadcast %17 : vector<1x64xf32> to vector<32x64xf32>
    %19 = arith.mulf %16, %18 : vector<32x64xf32>
    %c0_7 = arith.constant 0 : index
    %c0_8 = arith.constant 0 : index
    %20 = vector.load %arg3[%c0_7, %c0_8] : memref<1x64xf32, #tpu.memory_space<vmem>>, vector<1x64xf32>
    %21 = vector.broadcast %20 : vector<1x64xf32> to vector<32x64xf32>
    %22 = arith.addf %19, %21 : vector<32x64xf32>
    %c0_9 = arith.constant 0 : index
    %c0_10 = arith.constant 0 : index
    %23 = vector.load %arg4[%c0_9, %c0_10] : memref<32x64xf32, #tpu.memory_space<vmem>>, vector<32x64xf32>
    tpu.vector_store %arg4[%c0_9, %c0_10], %22 {strides = array<i32>} : memref<32x64xf32, #tpu.memory_space<vmem>>, vector<32x64xf32>,
    return
  }
  func.func @transform_0(%arg0: i32) -> (i32, i32) {
    %c0_i32 = arith.constant 0 : i32
    %c0_i32_0 = arith.constant 0 : i32
    return %arg0, %c0_i32 : i32, i32
  }
  func.func @transform_1(%arg0: i32) -> (i32, i32) {
    %c0_i32 = arith.constant 0 : i32
    %c0_i32_0 = arith.constant 0 : i32
    %c0_i32_1 = arith.constant 0 : i32
    return %c0_i32, %c0_i32_0 : i32, i32
  }
  func.func @transform_2(%arg0: i32) -> (i32, i32) {
    %c0_i32 = arith.constant 0 : i32
    %c0_i32_0 = arith.constant 0 : i32
    %c0_i32_1 = arith.constant 0 : i32
    return %c0_i32, %c0_i32_0 : i32, i32
  }
  func.func @transform_3(%arg0: i32) -> (i32, i32) {
    %c0_i32 = arith.constant 0 : i32
    %c0_i32_0 = arith.constant 0 : i32
    return %arg0, %c0_i32 : i32, i32
  }
}

</mosaic_0001>

<llo_original>
// kernel: tpu_custom_call.1
$region0: #{tpu_custom_call.1}
  #allocation0 [shape = 'u32[]', space=smem, size = 0x4, offset = 0x4, fixed_abs, tag = 'smem constant byte address 0x4 - core index']
  #allocation1 [shape = 'u32[144,128]{1,0:T(1,128)}', space=vmem, size = 0x12000, scoped, tag = 'internal scratch']
  %s0 = inlined_call_operand.hbm [shape: f32[32,64], index: 0, kind: input, shape index: {}]
  %s1 = inlined_call_operand.vmem [shape: f32[1,64], index: 1, kind: input, shape index: {}]
  %s2 = inlined_call_operand.vmem [shape: f32[1,64], index: 2, kind: input, shape index: {}]
  %s3 = inlined_call_operand.hbm [shape: f32[32,64], index: 3, kind: output, shape index: {}]
  %s4 = sld [smem:[#allocation0]]
  $region26: #{tpu_custom_call.1} parent=0
    _
  %s6 = ssub.s32 1, %s4
  %s7 = scalar_select 0, %s6, %s4
  $region1: #{tpu_custom_call.1} parent=0
    #allocation2 [shape = 'u8[16384]{0}', space=vmem, size = 0x4000, scoped, tag = 'input window, operand 0, single buffered']
    #allocation3 [shape = 's32[1]{0}', space=sflag, size = 0x4, scoped, tag = 'scoped memory for tpu_custom_call.1']
    #allocation4 [shape = 's32[1]{0}', space=sflag, size = 0x4, scoped, tag = 'scoped memory for tpu_custom_call.1']
    #allocation5 [shape = 'u8[16384]{0}', space=vmem, size = 0x4000, scoped, tag = 'output window, operand 0, single buffered']
    %8 = vsyncpa [#allocation3], 0
    %9 = vsyncpa [#allocation4], 0
    // Predicated region
    $region2: #{tpu_custom_call.1} parent=1 // pred_check
      _
    $region3: #{tpu_custom_call.1} parent=1 // pred_check_branch
      %11 = sbr.rel (0) target = $region5
    $region4: #{tpu_custom_call.1} parent=1 // pred_region
      %s13 = ssub.s32 512, 512
      %14 = vsyncadd [#allocation3], %s13
      %s15 = sshll.u32 [#allocation2], 4
      %s16 = int_to_ptr.vmem [resolvable:$true] %s15
      %21 = dma.hbm_to_vmem [thread:$0]  %s0, 512, %s16, [#allocation3], 128, 128, 8
    $region5: #{tpu_custom_call.1} parent=1 // pred_fallthru
      _
    // Predicated region
    $region6: #{tpu_custom_call.1} parent=1 // pred_check
      _
    $region7: #{tpu_custom_call.1} parent=1 // pred_check_branch
      %23 = sbr.rel (0) target = $region9
    $region8: #{tpu_custom_call.1} parent=1 // pred_region
      _
    $region9: #{tpu_custom_call.1} parent=1 // pred_fallthru
      _
    // Predicated region
    $region10: #{tpu_custom_call.1} parent=1 // pred_check
      _
    $region11: #{tpu_custom_call.1} parent=1 // pred_check_branch
      %25 = sbr.rel (0) target = $region13
    $region12: #{tpu_custom_call.1} parent=1 // pred_region
      _
    $region13: #{tpu_custom_call.1} parent=1 // pred_fallthru
      _
    // Predicated region
    $region14: #{tpu_custom_call.1} parent=1 // pred_check
      _
    $region15: #{tpu_custom_call.1} parent=1 // pred_check_branch
      %27 = sbr.rel (0) target = $region17
    $region16: #{tpu_custom_call.1} parent=1 // pred_region
      %28 = dma.done [#allocation3], 512
    $region17: #{tpu_custom_call.1} parent=1 // pred_fallthru
      _
    %v29 = vld [vmem:[#allocation2] sm:$0xff]
    %v30 = vld [vmem:[#allocation2 + $0x8] sm:$0xff]
    %v31 = vld [vmem:[#allocation2 + $0x10] sm:$0xff]
    %v32 = vld [vmem:[#allocation2 + $0x18] sm:$0xff]
    %vm33 = vcmask 523264
    %v34 = vsel %vm33, %v29, 0.0
    %35 = vadd.xlane.f32.xlu0 %v34
    %v36 = vpop.xlane.xlu0 %35
    %v37 = vsel %vm33, %v30, 0.0
    %38 = vadd.xlane.f32.xlu0 %v37
    %v39 = vpop.xlane.xlu0 %38
    %v40 = vsel %vm33, %v31, 0.0
    %41 = vadd.xlane.f32.xlu0 %v40
    %v42 = vpop.xlane.xlu0 %41
    %v43 = vsel %vm33, %v32, 0.0
    %44 = vadd.xlane.f32.xlu0 %v43
    %v45 = vpop.xlane.xlu0 %44
    %v46 = vrcp.pop 64.0
    %v47 = vmul.f32 %v36, %v46
    %v48 = vmul.f32 %v39, %v46
    %v49 = vmul.f32 %v42, %v46
    %v50 = vmul.f32 %v45, %v46
    %v51 = vsub.f32 %v29, %v47
    %v52 = vsub.f32 %v30, %v48
    %v53 = vsub.f32 %v31, %v49
    %v54 = vsub.f32 %v32, %v50
    %v55 = vmul.f32 %v51, %v51
    %v56 = vmul.f32 %v52, %v52
    %v57 = vmul.f32 %v53, %v53
    %v58 = vmul.f32 %v54, %v54
    %v59 = vsel %vm33, %v55, 0.0
    %60 = vadd.xlane.f32.xlu0 %v59
    %v61 = vpop.xlane.xlu0 %60
    %v62 = vsel %vm33, %v56, 0.0
    %63 = vadd.xlane.f32.xlu0 %v62
    %v64 = vpop.xlane.xlu0 %63
    %v65 = vsel %vm33, %v57, 0.0
    %66 = vadd.xlane.f32.xlu0 %v65
    %v67 = vpop.xlane.xlu0 %66
    %v68 = vsel %vm33, %v58, 0.0
    %69 = vadd.xlane.f32.xlu0 %v68
    %v70 = vpop.xlane.xlu0 %69
    %v71 = vmul.f32 %v61, %v46
    %v72 = vmul.f32 %v64, %v46
    %v73 = vmul.f32 %v67, %v46
    %v74 = vmul.f32 %v70, %v46
    %v75 = vadd.f32 %v71, 1e-05
    %v76 = vadd.f32 %v72, 1e-05
    %v77 = vadd.f32 %v73, 1e-05
    %v78 = vadd.f32 %v74, 1e-05
    %v79 = vrsqrt.pop %v75
    %v80 = vrsqrt.pop %v76
    %v81 = vrsqrt.pop %v77
    %v82 = vrsqrt.pop %v78
    %v83 = vmul.f32 %v51, %v79
    %v84 = vmul.f32 %v52, %v80
    %v85 = vmul.f32 %v53, %v81
    %v86 = vmul.f32 %v54, %v82
    %v87 = vld [vmem:[%s1] sm:$0x1]
    %v89 = vlaneseq
    %v90 = vshrl.u32 %v89, 7
    %v91 = vsub.s32 0, %v90
    %v92 = vrot.slane %v87, %v91
    %v94 = vmul.f32 %v83, %v92
    %v95 = vmul.f32 %v84, %v92
    %v96 = vmul.f32 %v85, %v92
    %v97 = vmul.f32 %v86, %v92
    %v98 = vld [vmem:[%s2] sm:$0x1]
    %v100 = vlaneseq
    %v101 = vshrl.u32 %v100, 7
    %v102 = vsub.s32 0, %v101
    %v103 = vrot.slane %v98, %v102
    %v105 = vadd.f32 %v94, %v103
    %v106 = vadd.f32 %v95, %v103
    %v107 = vadd.f32 %v96, %v103
    %v108 = vadd.f32 %v97, %v103
    %109 = vst.msk [vmem:[#allocation5] sm:$0xff] %vm33, %v105
    %110 = vst.msk [vmem:[#allocation5 + $0x8] sm:$0xff] %vm33, %v106
    %111 = vst.msk [vmem:[#allocation5 + $0x10] sm:$0xff] %vm33, %v107
    %112 = vst.msk [vmem:[#allocation5 + $0x18] sm:$0xff] %vm33, %v108
    // Predicated region
    $region18: #{tpu_custom_call.1} parent=1 // pred_check
      _
    $region19: #{tpu_custom_call.1} parent=1 // pred_check_branch
      %114 = sbr.rel (0) target = $region21
    $region20: #{tpu_custom_call.1} parent=1 // pred_region
      %s116 = ssub.s32 512, 512
      %117 = vsyncadd [#allocation4], %s116
      %s118 = sshll.u32 [#allocation5], 4
      %s119 = int_to_ptr.vmem [resolvable:$true] %s118
      %124 = dma.vmem_to_hbm [thread:$0]  %s119, 512, %s3, [#allocation4], 128, 128, 8
    $region21: #{tpu_custom_call.1} parent=1 // pred_fallthru
      _
    // Predicated region
    $region22: #{tpu_custom_call.1} parent=1 // pred_check
      _
    $region23: #{tpu_custom_call.1} parent=1 // pred_check_branch
      %126 = sbr.rel (0) target = $region25
    $region24: #{tpu_custom_call.1} parent=1 // pred_region
      %127 = dma.done [#allocation4], 512
    $region25: #{tpu_custom_call.1} parent=1 // pred_fallthru
      _
    %128 = vsyncpa [#allocation3], 1
    %129 = vsyncpa [#allocation4], 1

</llo_original>
